<compile_context>
chip_gen: v7x
topology: tpu7x:2x2x1
jax: 0.10.0
libtpu: 0.0.40
codegen_flags: <defaults>
</compile_context>

<pallas_src>
import functools

import jax
import jax.numpy as jnp
from jax import lax
from jax.experimental import pallas as pl
from jax.experimental.pallas import tpu as pltpu


def _mix_kernel(lam_ref, x_ref, o_ref):
    """o = lam * x + (1 - lam) * roll(x, 1, axis=0) for one (B, TD) block.

    lam_ref: (2,) f32 in SMEM -- [lambda, 1 - lambda].
    x_ref:   (B, TD) image tile in VMEM.
    o_ref:   (B, TD) output tile in VMEM (HBM-aliased with the input).
    """
    # Cast the scalars to the image dtype so bf16/fp16 tiles are mixed in
    # their own dtype (no f32 promotion -> half the vreg pressure).
    lam = lam_ref[0].astype(x_ref.dtype)
    one_minus_lam = lam_ref[1].astype(x_ref.dtype)
    x = x_ref[...]
    # torch.roll(x, 1, 0): out[0] = x[B-1], out[i] = x[i-1].  XLU sublane
    # rotate -- does not touch the VALU / load / store slots.
    x_prev = pltpu.roll(x, shift=1, axis=0)
    o_ref[...] = (lam * x + one_minus_lam * x_prev).astype(o_ref.dtype)


def _pick_tile_d(batch_size, d, itemsize, target_bytes=1 << 20, min_steps=8):
    """Lane-tile width TD along the flattened pixel axis.

    Sized by BYTES: B * TD * itemsize ~ 1 MiB (0.5-2 MiB is the ~85%+ HBM
    roofline regime), a multiple of 128 lanes.  Double-buffered in+out is
    4 x block, which stays well under v5e's 16 MiB scoped-VMEM default and
    v7x's 32 MiB even with bf16 sublane padding.  When D is large enough the
    grid keeps >= min_steps steps (>= 4 per TensorCore on v7x) so megacore
    sharding and double-buffering have work to pipeline, and TD prefers an
    exact divisor of D so no grid step hits the masked partial-store path.
    """
    if d <= 1024:
        return d  # tiny: one full-width block (full-dim block is always legal)

    # Bytes target -> lane width (multiple of 128).
    td = (target_bytes // max(batch_size * itemsize, 1)) // 128 * 128
    td = max(td, 128)

    # Keep >= min_steps grid steps (d > 1024 guarantees d // min_steps >= 128).
    steps_cap = (d // min_steps) // 128 * 128
    td = min(td, steps_cap)

    # Never exceed the array itself.
    td = min(td, max(d // 128 * 128, 128))

    # Prefer an exact divisor of D (unmasked full-width stores on every step).
    for cand in range(td, max(128, td // 2) - 1, -128):
        if d % cand == 0:
            return cand
    return td


def _mix_images(lam_pair_smem, x_flat):
    """Pixel mix: single HBM-streaming pass over (B, D), tiled along D."""
    b, d = x_flat.shape
    td = _pick_tile_d(b, d, x_flat.dtype.itemsize)
    grid = (pl.cdiv(d, td),)
    return pl.pallas_call(
        _mix_kernel,
        out_shape=jax.ShapeDtypeStruct((b, d), x_flat.dtype),
        grid=grid,
        in_specs=[
            pl.BlockSpec(memory_space=pltpu.MemorySpace.SMEM),  # [lam, 1-lam]
            pl.BlockSpec((b, td), lambda j: (0, j)),            # image tile
        ],
        out_specs=pl.BlockSpec((b, td), lambda j: (0, j)),
        # x_flat (input 1) and the mixed output (output 0) share HBM pages;
        # the batch is donated at the jit boundary so no defensive copy is
        # needed and no second B*D buffer is allocated.
        input_output_aliases={1: 0},
        compiler_params=pltpu.CompilerParams(
            # Shards the D-grid across the two TensorCores on v7x; measured
            # no-op on single-TC v5e/v6e (kept because it is free).
            dimension_semantics=("parallel",)),
    )(lam_pair_smem, x_flat)


@functools.partial(jax.jit,
                   static_argnames=("num_classes", "p", "alpha"),
                   donate_argnums=(0,))
def random_mixup(batch, target, key, *, num_classes, p=0.5, alpha=1.0):
    """JAX/Pallas equivalent of RandomMixUp.forward.

    batch:  float (B, C, H, W)   (donated: its HBM pages are reused for the output)
    target: integer (B,)
    Returns (mixed_batch (B, C, H, W), mixed_onehot_target (B, num_classes)).
    """
    if num_classes < 1:
        raise ValueError(
            f"Please provide a valid positive value for num_classes. Got {num_classes}")
    if alpha <= 0:
        raise ValueError("Alpha param can't be zero.")
    if batch.ndim != 4:
        raise ValueError(f"Batch ndim should be 4. Got {batch.ndim}")
    if target.ndim != 1:
        raise ValueError(f"Target ndim should be 1. Got {target.ndim}")
    if not jnp.issubdtype(batch.dtype, jnp.floating):
        raise TypeError(f"Batch dtype should be a float tensor. Got {batch.dtype}.")
    # TODO(synk): PyTorch mandates int64 targets; JAX's default int is int32,
    # so we only require an integer dtype here.
    if not jnp.issubdtype(target.dtype, jnp.integer):
        raise TypeError(f"Target dtype should be an integer tensor. Got {target.dtype}")

    B, C, H, W = batch.shape
    D = C * H * W

    # One-hot encode target (tiny glue, plain JAX).
    onehot = jax.nn.one_hot(target, num_classes, dtype=batch.dtype)

    # Randomness: apply with probability p, lambda ~ Beta(alpha, alpha).
    k_apply, k_lam = jax.random.split(key)
    apply_u = jax.random.uniform(k_apply, (), dtype=jnp.float32)
    lam = jax.random.beta(k_lam, alpha, alpha, dtype=jnp.float32)

    x_flat = batch.reshape(B, D)

    def _applied(operands):
        xf, oh, lam_ = operands
        lam_pair = jnp.stack([lam_, 1.0 - lam_]).astype(jnp.float32)  # SMEM scalars
        mixed_x = _mix_images(lam_pair, xf)
        # Target mix is B x num_classes: far too small for a pallas_call
        # (dispatch overhead + masked 10-wide stores); XLA fuses this for free.
        lam_t = lam_.astype(oh.dtype)
        mixed_t = lam_t * oh + (1.0 - lam_t) * jnp.roll(oh, 1, axis=0)
        return mixed_x, mixed_t

    def _passthrough(operands):
        xf, oh, _ = operands
        return xf, oh

    out_x_flat, out_t = lax.cond(
        apply_u < p, _applied, _passthrough, (x_flat, onehot, lam))

    return out_x_flat.reshape(B, C, H, W), out_t


if __name__ == "__main__":
    num_classes = 10
    B, C, H, W = 8, 4, 32, 32   # D = 4096 -> eight (8, 512) lane tiles

    root = jax.random.PRNGKey(0)
    k_data, k_tgt, k_mix = jax.random.split(root, 3)

    # `batch` is donated into random_mixup, so pass a fresh (but identical,
    # same PRNG key) array to every call and keep one un-donated copy for the
    # host-side reference math.
    def fresh_batch():
        return jax.random.normal(k_data, (B, C, H, W), dtype=jnp.float32)

    batch_ref = fresh_batch()
    target = jax.random.randint(k_tgt, (B,), 0, num_classes, dtype=jnp.int32)
    onehot = jax.nn.one_hot(target, num_classes, dtype=jnp.float32)

    # --- applied path: p=1.0 so the mix always fires ---
    mixed_x, mixed_t = random_mixup(
        fresh_batch(), target, k_mix, num_classes=num_classes, p=1.0, alpha=1.0)
    jax.block_until_ready((mixed_x, mixed_t))

    # Recompute the same lambda on the host and compare against a pure-JAX ref.
    _, k_lam = jax.random.split(k_mix)
    lam = jax.random.beta(k_lam, 1.0, 1.0, dtype=jnp.float32)
    ref_x = lam * batch_ref + (1.0 - lam) * jnp.roll(batch_ref, 1, axis=0)
    ref_t = lam * onehot + (1.0 - lam) * jnp.roll(onehot, 1, axis=0)

    assert mixed_x.shape == (B, C, H, W) and mixed_t.shape == (B, num_classes)
    assert jnp.allclose(mixed_x, ref_x, atol=1e-5, rtol=1e-5)
    assert jnp.allclose(mixed_t, ref_t, atol=1e-5, rtol=1e-5)

    # --- not-applied path: p=0.0 must be a bit-exact passthrough ---
    pass_x, pass_t = random_mixup(
        fresh_batch(), target, k_mix, num_classes=num_classes, p=0.0, alpha=1.0)
    jax.block_until_ready((pass_x, pass_t))
    assert jnp.array_equal(pass_x, batch_ref)
    assert jnp.array_equal(pass_t, onehot)

    print("KERNEL_OK")
</pallas_src>

<mosaic_0001>
module attributes {stable_mosaic.version = 11 : i64} {
  func.func @_mix_kernel(%arg0: i32, %arg1: memref<2xf32, #tpu.memory_space<smem>>, %arg2: memref<8x512xf32, #tpu.memory_space<vmem>>, %arg3: memref<8x512xf32, #tpu.memory_space<vmem>>) attributes {dimension_semantics = [#tpu.dimension_semantics<parallel>], iteration_bounds = array<i64: 8>, scalar_prefetch = 0 : i64, scratch_operands = 0 : i64, tpu.core_type = #tpu.core_type<tc>, window_params = [{transform_indices = @transform_0, window_bounds = array<i64: 2>}, {transform_indices = @transform_1, window_bounds = array<i64: 8, 512>}, {transform_indices = @transform_2, window_bounds = array<i64: 8, 512>}]} {
    %c0 = arith.constant 0 : index
    %0 = memref.load %arg1[%c0] : memref<2xf32, #tpu.memory_space<smem>>
    %c1 = arith.constant 1 : index
    %1 = memref.load %arg1[%c1] : memref<2xf32, #tpu.memory_space<smem>>
    %c0_0 = arith.constant 0 : index
    %c0_1 = arith.constant 0 : index
    %2 = vector.load %arg2[%c0_0, %c0_1] : memref<8x512xf32, #tpu.memory_space<vmem>>, vector<8x512xf32>
    %c1_i32 = arith.constant 1 : i32
    %3 = tpu.dynamic_rotate %2 by %c1_i32 dim 0 : vector<8x512xf32>, i32 -> vector<8x512xf32>
    %4 = vector.broadcast %0 : f32 to vector<8x512xf32>
    %5 = arith.mulf %4, %2 : vector<8x512xf32>
    %6 = vector.broadcast %1 : f32 to vector<8x512xf32>
    %7 = arith.mulf %6, %3 : vector<8x512xf32>
    %8 = arith.addf %5, %7 : vector<8x512xf32>
    %c0_2 = arith.constant 0 : index
    %c0_3 = arith.constant 0 : index
    %9 = vector.load %arg3[%c0_2, %c0_3] : memref<8x512xf32, #tpu.memory_space<vmem>>, vector<8x512xf32>
    tpu.vector_store %arg3[%c0_2, %c0_3], %8 {strides = array<i32>} : memref<8x512xf32, #tpu.memory_space<vmem>>, vector<8x512xf32>,
    return
  }
  func.func @transform_0(%arg0: i32) -> i32 {
    %c0_i32 = arith.constant 0 : i32
    %c0_i32_0 = arith.constant 0 : i32
    return %c0_i32 : i32
  }
  func.func @transform_1(%arg0: i32) -> (i32, i32) {
    %c0_i32 = arith.constant 0 : i32
    %c0_i32_0 = arith.constant 0 : i32
    return %c0_i32, %arg0 : i32, i32
  }
  func.func @transform_2(%arg0: i32) -> (i32, i32) {
    %c0_i32 = arith.constant 0 : i32
    %c0_i32_0 = arith.constant 0 : i32
    return %c0_i32, %arg0 : i32, i32
  }
}

</mosaic_0001>

<llo_original>
// kernel: branch_1_fun.4
$region0: #{branch_1_fun.4}
  #allocation0 [shape = 'u32[]', space=smem, size = 0x4, offset = 0x4, fixed_abs, tag = 'smem constant byte address 0x4 - core index']
  #allocation1 [shape = 'u32[144,128]{1,0:T(1,128)}', space=vmem, size = 0x12000, scoped, tag = 'internal scratch']
  %s0 = inlined_call_operand.vmem [shape: f32[2], index: 0, kind: input, shape index: {}]
  %s1 = inlined_call_operand.hbm [shape: f32[8,4096], index: 1, kind: input, shape index: {}, may-alias: {1,2}]
  %s2 = inlined_call_operand.hbm [shape: f32[8,4096], index: 2, kind: output, shape index: {}, may-alias: {1,2}]
  %s3 = sld [smem:[#allocation0]]
  $region49: #{branch_1_fun.4} parent=0
    _
  %s5 = ssub.s32 1, %s3
  %s6 = scalar_select 0, %s5, %s3
  $region1: #{branch_1_fun.4} parent=0
    #allocation2 [shape = 'u8[512]{0}', space=smem, size = 0x200, scoped, tag = 'input window, operand 0, single buffered']
    #allocation3 [shape = 's32[2]{0}', space=sflag, size = 0x8, scoped, tag = 'scoped memory for branch_1_fun.4']
    #allocation4 [shape = 's32[2]{0}', space=sflag, size = 0x8, scoped, tag = 'scoped memory for branch_1_fun.4']
    #allocation5 [shape = 's32[2]{0}', space=sflag, size = 0x8, scoped, tag = 'scoped memory for branch_1_fun.4']
    #allocation6 [shape = 'u8[32768]{0}', space=vmem, size = 0x8000, scoped, tag = 'input window, operand 1']
    #allocation7 [shape = 'u8[32768]{0}', space=vmem, size = 0x8000, scoped, tag = 'output window, operand 0']
    %7 = vsyncpa [#allocation5], 0
    %8 = vsyncpa [#allocation3], 0
    %s9 = scalar_lea.sflag [#allocation3], 1
    %10 = vsyncpa %s9, 0
    %11 = vsyncpa [#allocation4], 0
    %s12 = scalar_lea.sflag [#allocation4], 1
    %13 = vsyncpa %s12, 0
    loop: start=0, step=1, limit=10
    $region2: #{branch_1_fun.4} parent=1 // loop_pre_header
      _
    $region3: #{branch_1_fun.4} parent=1 // loop_header
      %s15 = sphi 0, %s19
      %p16 = scmp.ge.s32.totalorder %s15, 10
      %s23 = sphi 0, %s23
      %s25 = sphi 0, %s23
      %s26 = sphi 0, %s25
      %s40 = sphi 0, %s26
      %s46 = sphi 0, %s48
      %s49 = sphi 0, %s46
      %s50 = sphi 0, %s49
      %s66 = sphi 0, %s50
      %s72 = sphi 0, %s74
      %s75 = sphi 0, %s72
      %s76 = sphi 0, %s75
      %s92 = sphi 0, %s76
    $region4: #{branch_1_fun.4} parent=1 // loop_header_branch
      %18 = sbr.rel (%p16) target = $region8
    $region5: #{branch_1_fun.4} parent=1 // loop_body
      %s20 = ssub.s32 %s15, 1
      %s21 = ssub.s32 %s15, 2
      %s22 = sadd.s32 %s15, 1
      %s24 = sadd.s32 %s23, 1
      %p27 = scmp.eq.s32.totalorder %s15, 7
      %p28 = scmp.ne.s32.totalorder %s23, %s25
      %p29 = scmp.eq.s32.totalorder %s15, 0
      %p30 = por %p28, %p29
      %p31 = scmp.ne.s32.totalorder %s23, %s25
      %p32 = scmp.eq.s32.totalorder %s20, 7
      %p33 = por %p31, %p32
      %p34 = scmp.ne.s32.totalorder %s25, %s26
      %p35 = scmp.eq.s32.totalorder %s20, 0
      %p36 = por %p34, %p35
      %p37 = scmp.ne.s32.totalorder %s25, %s26
      %p38 = scmp.eq.s32.totalorder %s21, 7
      %p39 = por %p37, %p38
      %p41 = scmp.ne.s32.totalorder %s26, %s40
      %p42 = scmp.eq.s32.totalorder %s21, 0
      %p43 = por %p41, %p42
      %s44 = ssub.s32 %s15, %s22
      %p45 = scmp.eq.s32.totalorder %s44, 0
      %s47 = sadd.s32 %s46, 1
      %s48 = scalar_select %p45, %s46, %s47
      %p51 = pneg %p45
      %p52 = scmp.eq.s32.totalorder %s15, 7
      %p53 = por %p51, %p52
      %p54 = scmp.ne.s32.totalorder %s46, %s49
      %p55 = scmp.eq.s32.totalorder %s15, 0
      %p56 = por %p54, %p55
      %p57 = scmp.ne.s32.totalorder %s46, %s49
      %p58 = scmp.eq.s32.totalorder %s20, 7
      %p59 = por %p57, %p58
      %p60 = scmp.ne.s32.totalorder %s49, %s50
      %p61 = scmp.eq.s32.totalorder %s20, 0
      %p62 = por %p60, %p61
      %p63 = scmp.ne.s32.totalorder %s49, %s50
      %p64 = scmp.eq.s32.totalorder %s21, 7
      %p65 = por %p63, %p64
      %p67 = scmp.ne.s32.totalorder %s50, %s66
      %p68 = scmp.eq.s32.totalorder %s21, 0
      %p69 = por %p67, %p68
      %s70 = ssub.s32 %s15, %s22
      %p71 = scmp.eq.s32.totalorder %s70, 0
      %s73 = sadd.s32 %s72, 1
      %s74 = scalar_select %p71, %s72, %s73
      %p77 = pneg %p71
      %p78 = scmp.eq.s32.totalorder %s15, 7
      %p79 = por %p77, %p78
      %p80 = scmp.ne.s32.totalorder %s72, %s75
      %p81 = scmp.eq.s32.totalorder %s15, 0
      %p82 = por %p80, %p81
      %p83 = scmp.ne.s32.totalorder %s72, %s75
      %p84 = scmp.eq.s32.totalorder %s20, 7
      %p85 = por %p83, %p84
      %p86 = scmp.ne.s32.totalorder %s75, %s76
      %p87 = scmp.eq.s32.totalorder %s20, 0
      %p88 = por %p86, %p87
      %p89 = scmp.ne.s32.totalorder %s75, %s76
      %p90 = scmp.eq.s32.totalorder %s21, 7
      %p91 = por %p89, %p90
      %p93 = scmp.ne.s32.totalorder %s76, %s92
      %p94 = scmp.eq.s32.totalorder %s21, 0
      %p95 = por %p93, %p94
      %p96 = scmp.le.s32.totalorder 1, %s15
      %p97 = scmp.lt.s32.totalorder %s15, 9
      %p98 = pnand %p96, %p97
      %p99 = pneg %p98
      // Predicated region
      $region9: #{branch_1_fun.4} parent=5 // pred_check
        _
      $region10: #{branch_1_fun.4} parent=5 // pred_check_branch
        %101 = sbr.rel (%p98) target = $region12
      $region11: #{branch_1_fun.4} parent=5 // pred_region
        %s102 = ssub.s32 %s15, 1
        // Predicated region
        $region13: #{branch_1_fun.4} parent=11 // pred_check
          %p103 = pneg %p36
        $region14: #{branch_1_fun.4} parent=11 // pred_check_branch
          %105 = sbr.rel (%p103) target = $region16
        $region15: #{branch_1_fun.4} parent=11 // pred_region
          %s107 = ssub.s32 16, 16
          %108 = vsyncadd [#allocation5], %s107
          %s110 = sshll.u32 %s0, 4
          %s111 = int_to_ptr.vmem [resolvable:$true] %s110
          %113 = dma.vmem_to_smem %s111, 16, [#allocation2], [#allocation5]
        $region16: #{branch_1_fun.4} parent=11 // pred_fallthru
          _
      $region12: #{branch_1_fun.4} parent=5 // pred_fallthru
        _
      %p114 = scmp.lt.s32.totalorder %s15, 8
      // Predicated region
      $region17: #{branch_1_fun.4} parent=5 // pred_check
        %p115 = pneg %p114
      $region18: #{branch_1_fun.4} parent=5 // pred_check_branch
        %117 = sbr.rel (%p115) target = $region20
      $region19: #{branch_1_fun.4} parent=5 // pred_region
        // Predicated region
        $region21: #{branch_1_fun.4} parent=19 // pred_check
          %p118 = pneg %p56
        $region22: #{branch_1_fun.4} parent=19 // pred_check_branch
          %120 = sbr.rel (%p118) target = $region24
        $region23: #{branch_1_fun.4} parent=19 // pred_region
          %s121 = sand.u32 %s46, 1
          %s122 = scalar_lea.sflag [#allocation3], %s121
          %s123 = sand.u32 %s46, 1
          %s124 = smul.addr %s123, 32
          %s125 = scalar_lea.vmem [#allocation6], %s124
          %s126 = smul.u32 4, %s15
          %s128 = ssub.s32 512, 512
          %129 = vsyncadd %s122, %s128
          %s130 = smul.addr %s126, 128
          %s131 = scalar_lea.hbm %s1, %s130
          %s133 = sshll.u32 %s125, 4
          %s134 = int_to_ptr.vmem [resolvable:$true] %s133
          %136 = dma.hbm_to_vmem [thread:$0]  %s131, 512, %s134, %s122
        $region24: #{branch_1_fun.4} parent=19 // pred_fallthru
          _
      $region20: #{branch_1_fun.4} parent=5 // pred_fallthru
        _
      %p137 = scmp.le.s32.totalorder 1, %s15
      %p138 = scmp.lt.s32.totalorder %s15, 9
      %p139 = pnand %p137, %p138
      %p140 = pneg %p139
      // Predicated region
      $region25: #{branch_1_fun.4} parent=5 // pred_check
        _
      $region26: #{branch_1_fun.4} parent=5 // pred_check_branch
        %142 = sbr.rel (%p139) target = $region28
      $region27: #{branch_1_fun.4} parent=5 // pred_region
        %s143 = ssub.s32 %s15, 1
        // Predicated region
        $region29: #{branch_1_fun.4} parent=27 // pred_check
          %p144 = pneg %p36
        $region30: #{branch_1_fun.4} parent=27 // pred_check_branch
          %146 = sbr.rel (%p144) target = $region32
        $region31: #{branch_1_fun.4} parent=27 // pred_region
          %147 = dma.done [#allocation5], 16
        $region32: #{branch_1_fun.4} parent=27 // pred_fallthru
          _
        %s148 = sand.u32 %s49, 1
        %s149 = scalar_lea.sflag [#allocation3], %s148
        %s150 = sand.u32 %s49, 1
        %s151 = smul.addr %s150, 32
        %s152 = scalar_lea.vmem [#allocation6], %s151
        // Predicated region
        $region33: #{branch_1_fun.4} parent=27 // pred_check
          %p153 = pneg %p62
        $region34: #{branch_1_fun.4} parent=27 // pred_check_branch
          %155 = sbr.rel (%p153) target = $region36
        $region35: #{branch_1_fun.4} parent=27 // pred_region
          %156 = dma.done %s149, 512
        $region36: #{branch_1_fun.4} parent=27 // pred_fallthru
          _
        %157 = sfence
        %p158 = pneg %p36
        %p159 = pneg %p33
        %s160 = sand.u32 %s49, 1
        %s161 = scalar_lea.sflag [#allocation3], %s160
        %s162 = sand.u32 %s49, 1
        %s163 = smul.addr %s162, 32
        %s164 = scalar_lea.vmem [#allocation6], %s163
        %p165 = pneg %p62
        %p166 = pneg %p59
        %p167 = pneg %p88
        %p168 = pneg %p85
        %s169 = sand.u32 %s75, 1
        %s170 = scalar_lea.sflag [#allocation4], %s169
        %s171 = sand.u32 %s75, 1
        %s172 = smul.addr %s171, 32
        %s173 = scalar_lea.vmem [#allocation7], %s172
        %s174 = smul.u32 4, %s20
        %s175 = smul.u32 4, %s20
        %s176 = sld [smem:[#allocation2]]
        %s177 = sld [smem:[#allocation2 + $0x1]]
        %v178 = vld [vmem:[%s152] sm:$0xff]
        %v179 = vld [vmem:[%s152 + $0x8] sm:$0xff]
        %v180 = vld [vmem:[%s152 + $0x10] sm:$0xff]
        %v181 = vld [vmem:[%s152 + $0x18] sm:$0xff]
        %v182 = vrot.slane %v178, 7
        %v183 = vrot.slane %v179, 7
        %v184 = vrot.slane %v180, 7
        %v185 = vrot.slane %v181, 7
        %v186 = vstv %s176
        %v187 = vmul.f32 %v186, %v178
        %v188 = vmul.f32 %v186, %v179
        %v189 = vmul.f32 %v186, %v180
        %v190 = vmul.f32 %v186, %v181
        %v191 = vstv %s177
        %v192 = vmul.f32 %v191, %v182
        %v193 = vmul.f32 %v191, %v183
        %v194 = vmul.f32 %v191, %v184
        %v195 = vmul.f32 %v191, %v185
        %v196 = vadd.f32 %v187, %v192
        %v197 = vadd.f32 %v188, %v193
        %v198 = vadd.f32 %v189, %v194
        %v199 = vadd.f32 %v190, %v195
        %200 = vst [vmem:[%s173] sm:$0xff] %v196
        %201 = vst [vmem:[%s173 + $0x8] sm:$0xff] %v197
        %202 = vst [vmem:[%s173 + $0x10] sm:$0xff] %v198
        %203 = vst [vmem:[%s173 + $0x18] sm:$0xff] %v199
        %s204 = sand.u32 %s75, 1
        %s205 = scalar_lea.sflag [#allocation4], %s204
        %s206 = sand.u32 %s75, 1
        %s207 = smul.addr %s206, 32
        %s208 = scalar_lea.vmem [#allocation7], %s207
        // Predicated region
        $region37: #{branch_1_fun.4} parent=27 // pred_check
          %p209 = pneg %p85
        $region38: #{branch_1_fun.4} parent=27 // pred_check_branch
          %211 = sbr.rel (%p209) target = $region40
        $region39: #{branch_1_fun.4} parent=27 // pred_region
          %s212 = smul.u32 4, %s20
          %s214 = ssub.s32 512, 512
          %215 = vsyncadd %s205, %s214
          %s216 = smul.addr %s212, 128
          %s217 = scalar_lea.hbm %s2, %s216
          %s219 = sshll.u32 %s208, 4
          %s220 = int_to_ptr.vmem [resolvable:$true] %s219
          %222 = dma.vmem_to_hbm [thread:$0]  %s220, 512, %s217, %s205
        $region40: #{branch_1_fun.4} parent=27 // pred_fallthru
          _
      $region28: #{branch_1_fun.4} parent=5 // pred_fallthru
        _
      %p223 = scmp.le.s32.totalorder 2, %s15
      // Predicated region
      $region41: #{branch_1_fun.4} parent=5 // pred_check
        %p224 = pneg %p223
      $region42: #{branch_1_fun.4} parent=5 // pred_check_branch
        %226 = sbr.rel (%p224) target = $region44
      $region43: #{branch_1_fun.4} parent=5 // pred_region
        %s227 = ssub.s32 %s15, 2
        // Predicated region
        $region45: #{branch_1_fun.4} parent=43 // pred_check
          %p228 = pneg %p91
        $region46: #{branch_1_fun.4} parent=43 // pred_check_branch
          %230 = sbr.rel (%p228) target = $region48
        $region47: #{branch_1_fun.4} parent=43 // pred_region
          %s231 = sand.u32 %s76, 1
          %s232 = scalar_lea.sflag [#allocation4], %s231
          %s233 = sand.u32 %s76, 1
          %s234 = smul.addr %s233, 32
          %s235 = scalar_lea.vmem [#allocation7], %s234
          %236 = dma.done %s232, 512
        $region48: #{branch_1_fun.4} parent=43 // pred_fallthru
          _
      $region44: #{branch_1_fun.4} parent=5 // pred_fallthru
        _
    $region6: #{branch_1_fun.4} parent=1 // loop_footer
      %s19 = sadd.s32 1, %s15
    $region7: #{branch_1_fun.4} parent=1 // loop_footer_branch
      %14 = sbr.rel target = $region3
    $region8: #{branch_1_fun.4} parent=1 // loop_exit
      _
    %237 = vsyncpa [#allocation3], 1
    %s238 = scalar_lea.sflag [#allocation3], 1
    %239 = vsyncpa %s238, 1
    %240 = vsyncpa [#allocation4], 1
    %s241 = scalar_lea.sflag [#allocation4], 1
    %242 = vsyncpa %s241, 1
    %243 = vsyncpa [#allocation5], 1
    %s244 = scalar_lea.sflag [#allocation5], 1
    %245 = vsyncpa %s244, 1

</llo_original>
